<compile_context>
chip_gen: v7x
topology: tpu7x:2x2x1
jax: 0.10.0
libtpu: 0.0.40
codegen_flags: <defaults>
</compile_context>

<pallas_src>
import jax
import jax.numpy as jnp
from jax.experimental import pallas as pl
from jax.experimental.pallas import tpu as pltpu


_OUT_SUB, _OUT_LANE = 8, 128  # lane-dense per-core partial output block


def _detect_num_tensorcores():
    """2 TensorCores per chip only on v7x; v5e/v6e are single-TC."""
    try:
        kind = jax.devices()[0].device_kind.lower()
    except Exception:
        return 1
    return 2 if "v7" in kind else 1


def _vmem_capacity_bytes():
    try:
        info = pltpu.get_tpu_info()
        cap = getattr(info, "vmem_capacity_bytes", None)
        if cap:
            return int(cap)
    except Exception:
        pass
    return 128 * 1024 * 1024  # v5e/v6e default


def _auto_tile_n(V, itemsize, n_rows, n_cores, vmem_cap):
    """Largest row tile whose double-buffered props tile fits the budget."""
    per_buffer = min(6 * 1024 * 1024, vmem_cap // 16)   # 6 MiB (<=4 MiB on v7x)
    t = per_buffer // max(1, V * itemsize)
    t = max(8, min(1024, t))
    rows_per_core = ((pl.cdiv(n_rows, n_cores) + 7) // 8) * 8
    t = min(t, rows_per_core, max(8, (n_rows // 8) * 8))  # don't over-tile tiny inputs
    return max(8, (t // 8) * 8)


def word_cross_entropy(props, tgt, *, tile_n=None, n_cores=None):
    """props: (B, S, V) float (any float dtype); tgt: (B, S) int.

    Returns (loss, corrects, tgt_sum) matching the PyTorch WordCrossEntropy forward.
    """
    B, S, V = props.shape
    N = B * S

    props2 = props.reshape(N, V)                  # native dtype, no HBM copy
    tgt2 = tgt.reshape(N, 1).astype(jnp.int32)

    n_valid = N
    if N < 8:                                     # degenerate tiny case only
        pad = 8 - N
        props2 = jnp.pad(props2, ((0, pad), (0, 0)))
        tgt2 = jnp.pad(tgt2, ((0, pad), (0, 0)))
        N = 8

    if n_cores is None:
        n_cores = _detect_num_tensorcores()
    vmem_cap = _vmem_capacity_bytes()
    if tile_n is None:
        tile_n = _auto_tile_n(V, props2.dtype.itemsize, N, n_cores, vmem_cap)
    tile_n = max(8, (tile_n // 8) * 8)

    n_row_tiles = pl.cdiv(N, tile_n)              # tiles that touch real rows
    tiles_per_core = pl.cdiv(n_row_tiles, n_cores)
    last_tile = n_row_tiles - 1

    # Lane-index iota, fetched once and VMEM-resident across the whole grid.
    col = jax.lax.broadcasted_iota(jnp.int32, (1, V), 1)

    def row_block(c, i):
        # Clamp fully-out-of-range tiles onto the last real tile; the in-kernel
        # row-validity mask zeroes their contribution.
        t = c * tiles_per_core + i
        return (jnp.minimum(t, last_tile), 0)

    def kernel(col_ref, props_ref, tgt_ref, loss_ref, corr_ref, cnt_ref,
               loss_acc, corr_acc, cnt_acc):
        c = pl.program_id(0)
        i = pl.program_id(1)

        # Re-init the per-core accumulators at the start of each core's shard.
        @pl.when(i == 0)
        def _():
            loss_acc[...] = jnp.zeros_like(loss_acc)
            corr_acc[...] = jnp.zeros_like(corr_acc)
            cnt_acc[...] = jnp.zeros_like(cnt_acc)

        p = props_ref[...]            # (tile_n, V) — native dtype (bf16 stays bf16)
        t = tgt_ref[...]              # (tile_n, 1) int32
        lane = col_ref[...]           # (1, V) int32, resident

        # Ragged-tail handling: mask rows whose global index is past n_valid.
        base = (c * tiles_per_core + i) * tile_n
        row_ids = base + jax.lax.broadcasted_iota(jnp.int32, (tile_n, 1), 0)
        row_valid = row_ids < n_valid
        mask_b = jnp.logical_and(t > 0, row_valid)            # (tile_n, 1) bool

        # Gather props at the target index (exactly one match per row -> exact sum).
        onehot = lane == t                                      # (tile_n, V)
        tgt_props = jnp.sum(
            jnp.where(onehot, p, jnp.zeros((), p.dtype)),
            axis=-1, keepdims=True).astype(jnp.float32)         # (tile_n, 1) f32

        # argmax with first-index tie-breaking (matches torch.max), in native dtype.
        row_max = jnp.max(p, axis=-1, keepdims=True)
        is_max = p == row_max
        idx = jnp.min(jnp.where(is_max, lane, V), axis=-1, keepdims=True)

        # Accumulate per-row partials; boolean where() is NaN-safe for garbage tail rows.
        loss_acc[...] += jnp.where(mask_b, tgt_props, 0.0)
        corr_acc[...] += jnp.where(jnp.logical_and(mask_b, idx == t), 1.0, 0.0)
        cnt_acc[...] += mask_b.astype(jnp.float32)

        # On this core's last step, reduce to scalars into its lane-dense output block.
        @pl.when(i == pl.num_programs(1) - 1)
        def _():
            loss_ref[...] = jnp.full(loss_ref.shape, jnp.sum(loss_acc[...]), jnp.float32)
            corr_ref[...] = jnp.full(corr_ref.shape, jnp.sum(corr_acc[...]), jnp.float32)
            cnt_ref[...] = jnp.full(cnt_ref.shape, jnp.sum(cnt_acc[...]), jnp.float32)

    part_shape = jax.ShapeDtypeStruct((n_cores, _OUT_SUB, _OUT_LANE), jnp.float32)
    part_spec = pl.BlockSpec((1, _OUT_SUB, _OUT_LANE), lambda c, i: (c, 0, 0))

    if n_cores > 1 and hasattr(pltpu, "CORE_PARALLEL"):
        dim_sem = (pltpu.CORE_PARALLEL, pltpu.ARBITRARY)       # real 2-TC sharding on v7x
    elif n_cores > 1:
        dim_sem = ("parallel", "arbitrary")
    else:
        dim_sem = ("arbitrary", "arbitrary")

    vmem_limit = int(min(40 * 1024 * 1024, vmem_cap * 3 // 5))

    loss_p, corr_p, cnt_p = pl.pallas_call(
        kernel,
        out_shape=(part_shape, part_shape, part_shape),
        grid_spec=pltpu.PrefetchScalarGridSpec(
            num_scalar_prefetch=0,
            grid=(n_cores, tiles_per_core),
            in_specs=[
                pl.BlockSpec((1, V), lambda c, i: (0, 0)),      # iota (fetched once)
                pl.BlockSpec((tile_n, V), row_block),           # props tile (native dtype)
                pl.BlockSpec((tile_n, 1), row_block),           # targets tile
            ],
            out_specs=(part_spec, part_spec, part_spec),
            scratch_shapes=[
                pltpu.VMEM((tile_n, 1), jnp.float32),           # loss partial rows
                pltpu.VMEM((tile_n, 1), jnp.float32),           # corrects partial rows
                pltpu.VMEM((tile_n, 1), jnp.float32),           # mask-count partial rows
            ],
        ),
        compiler_params=pltpu.CompilerParams(
            dimension_semantics=dim_sem,
            vmem_limit_bytes=vmem_limit,
        ),
    )(col, props2, tgt2)

    # Combine per-core partials, THEN negate/divide (order matters).
    loss_sum = jnp.sum(loss_p[:, 0, 0])
    corrects = jnp.sum(corr_p[:, 0, 0])
    tgt_sum = jnp.sum(cnt_p[:, 0, 0])
    loss = -loss_sum / tgt_sum     # NOTE: tgt_sum == 0 -> NaN/Inf, same as PyTorch
    return loss, corrects, tgt_sum


def _reference(props, tgt):
    """Plain-JAX mirror of the PyTorch forward (for a correctness check)."""
    tgt_props = jnp.take_along_axis(props, tgt[..., None], axis=2)[..., 0]
    mask = (tgt > 0).astype(jnp.float32)
    tgt_sum = mask.sum()
    loss = -(tgt_props.astype(jnp.float32) * mask).sum() / tgt_sum
    index = jnp.argmax(props, axis=-1)
    corrects = ((index == tgt).astype(jnp.float32) * mask).sum()
    return loss, corrects, tgt_sum


if __name__ == "__main__":
    key = jax.random.PRNGKey(0)
    k1, k2, k3, k4, k5, k6 = jax.random.split(key, 6)

    # Case 1: small, evenly tiled, f32.
    B, S, V = 2, 8, 32
    props = jax.random.normal(k1, (B, S, V), dtype=jnp.float32)  # acts as log-probs
    tgt = jax.random.randint(k2, (B, S), minval=0, maxval=V, dtype=jnp.int32)
    loss, corrects, tgt_sum = word_cross_entropy(props, tgt)
    jax.block_until_ready((loss, corrects, tgt_sum))
    rl, rc, rs = _reference(props, tgt)
    assert jnp.allclose(loss, rl, rtol=1e-5, atol=1e-5), (loss, rl)
    assert jnp.allclose(corrects, rc), (corrects, rc)
    assert jnp.allclose(tgt_sum, rs), (tgt_sum, rs)

    # Case 2: ragged N (15 rows) — exercises the in-kernel tail mask (no props pad).
    B2, S2, V2 = 3, 5, 48
    props_r = jax.random.normal(k3, (B2, S2, V2), dtype=jnp.float32)
    tgt_r = jax.random.randint(k4, (B2, S2), minval=0, maxval=V2, dtype=jnp.int32)
    loss2, corr2, sum2 = word_cross_entropy(props_r, tgt_r)
    jax.block_until_ready((loss2, corr2, sum2))
    rl2, rc2, rs2 = _reference(props_r, tgt_r)
    assert jnp.allclose(loss2, rl2, rtol=1e-5, atol=1e-5), (loss2, rl2)
    assert jnp.allclose(corr2, rc2), (corr2, rc2)
    assert jnp.allclose(sum2, rs2), (sum2, rs2)

    # Case 3: bf16 logits — exercises the native-dtype (no f32 tile cast) path.
    B3, S3, V3 = 2, 8, 128
    props_b = jax.random.normal(k5, (B3, S3, V3), dtype=jnp.bfloat16)
    tgt_b = jax.random.randint(k6, (B3, S3), minval=0, maxval=V3, dtype=jnp.int32)
    loss3, corr3, sum3 = word_cross_entropy(props_b, tgt_b)
    jax.block_until_ready((loss3, corr3, sum3))
    rl3, rc3, rs3 = _reference(props_b, tgt_b)
    assert jnp.allclose(loss3, rl3, rtol=1e-4, atol=1e-4), (loss3, rl3)
    assert jnp.allclose(corr3, rc3), (corr3, rc3)
    assert jnp.allclose(sum3, rs3), (sum3, rs3)

    print("KERNEL_OK")
</pallas_src>

<mosaic_0001>
module attributes {stable_mosaic.version = 11 : i64} {
  func.func @kernel(%arg0: i32, %arg1: i32, %arg2: memref<1x32xi32, #tpu.memory_space<vmem>>, %arg3: memref<16x32xf32, #tpu.memory_space<vmem>>, %arg4: memref<16x1xi32, #tpu.memory_space<vmem>>, %arg5: memref<1x8x128xf32, #tpu.memory_space<vmem>>, %arg6: memref<1x8x128xf32, #tpu.memory_space<vmem>>, %arg7: memref<1x8x128xf32, #tpu.memory_space<vmem>>, %arg8: memref<16x1xf32, #tpu.memory_space<vmem>>, %arg9: memref<16x1xf32, #tpu.memory_space<vmem>>, %arg10: memref<16x1xf32, #tpu.memory_space<vmem>>) attributes {dimension_semantics = [#tpu.dimension_semantics<arbitrary>, #tpu.dimension_semantics<arbitrary>], iteration_bounds = array<i64: 1, 1>, scalar_prefetch = 0 : i64, scratch_operands = 3 : i64, tpu.core_type = #tpu.core_type<tc>, window_params = [{pipeline_mode = #tpu.pipeline_mode<synchronous>, transform_indices = @transform_0, window_bounds = array<i64: 1, 32>}, {transform_indices = @transform_1, window_bounds = array<i64: 16, 32>}, {transform_indices = @transform_2, window_bounds = array<i64: 16, 1>}, {transform_indices = @transform_3, window_bounds = array<i64: 1, 8, 128>}, {transform_indices = @transform_4, window_bounds = array<i64: 1, 8, 128>}, {transform_indices = @transform_5, window_bounds = array<i64: 1, 8, 128>}]} {
    %c0_i32 = arith.constant 0 : i32
    %0 = arith.cmpi eq, %arg1, %c0_i32 : i32
    %1 = arith.extui %0 : i1 to i32
    %c0_i32_0 = arith.constant 0 : i32
    %2 = arith.cmpi ne, %1, %c0_i32_0 : i32
    scf.if %2 {
      %cst_28 = arith.constant 0.000000e+00 : f32
      %55 = vector.broadcast %cst_28 : f32 to vector<16x1xf32>
      %c0_29 = arith.constant 0 : index
      %c0_30 = arith.constant 0 : index
      %56 = vector.load %arg8[%c0_29, %c0_30] : memref<16x1xf32, #tpu.memory_space<vmem>>, vector<16x1xf32>
      tpu.vector_store %arg8[%c0_29, %c0_30], %55 {strides = array<i32>} : memref<16x1xf32, #tpu.memory_space<vmem>>, vector<16x1xf32>,
      %cst_31 = arith.constant 0.000000e+00 : f32
      %57 = vector.broadcast %cst_31 : f32 to vector<16x1xf32>
      %c0_32 = arith.constant 0 : index
      %c0_33 = arith.constant 0 : index
      %58 = vector.load %arg9[%c0_32, %c0_33] : memref<16x1xf32, #tpu.memory_space<vmem>>, vector<16x1xf32>
      tpu.vector_store %arg9[%c0_32, %c0_33], %57 {strides = array<i32>} : memref<16x1xf32, #tpu.memory_space<vmem>>, vector<16x1xf32>,
      %cst_34 = arith.constant 0.000000e+00 : f32
      %59 = vector.broadcast %cst_34 : f32 to vector<16x1xf32>
      %c0_35 = arith.constant 0 : index
      %c0_36 = arith.constant 0 : index
      %60 = vector.load %arg10[%c0_35, %c0_36] : memref<16x1xf32, #tpu.memory_space<vmem>>, vector<16x1xf32>
      tpu.vector_store %arg10[%c0_35, %c0_36], %59 {strides = array<i32>} : memref<16x1xf32, #tpu.memory_space<vmem>>, vector<16x1xf32>,
    } else {
    }
    %c0 = arith.constant 0 : index
    %c0_1 = arith.constant 0 : index
    %3 = vector.load %arg3[%c0, %c0_1] : memref<16x32xf32, #tpu.memory_space<vmem>>, vector<16x32xf32>
    %c0_2 = arith.constant 0 : index
    %c0_3 = arith.constant 0 : index
    %4 = vector.load %arg4[%c0_2, %c0_3] : memref<16x1xi32, #tpu.memory_space<vmem>>, vector<16x1xi32>
    %c0_4 = arith.constant 0 : index
    %c0_5 = arith.constant 0 : index
    %5 = vector.load %arg2[%c0_4, %c0_5] : memref<1x32xi32, #tpu.memory_space<vmem>>, vector<1x32xi32>
    %c1_i32 = arith.constant 1 : i32
    %6 = arith.muli %arg0, %c1_i32 : i32
    %7 = arith.addi %6, %arg1 : i32
    %c16_i32 = arith.constant 16 : i32
    %8 = arith.muli %7, %c16_i32 : i32
    %9 = tpu.iota {dimensions = array<i32: 0>} : vector<16x1xi32>
    %10 = vector.broadcast %8 : i32 to vector<16x1xi32>
    %11 = arith.addi %10, %9 : vector<16x1xi32>
    %c16_i32_6 = arith.constant 16 : i32
    %12 = vector.broadcast %c16_i32_6 : i32 to vector<16x1xi32>
    %13 = arith.cmpi slt, %11, %12 : vector<16x1xi32>
    %c0_i32_7 = arith.constant 0 : i32
    %14 = vector.broadcast %c0_i32_7 : i32 to vector<16x1xi32>
    %15 = arith.cmpi sgt, %4, %14 : vector<16x1xi32>
    %16 = arith.andi %15, %13 : vector<16x1xi1>
    %17 = vector.broadcast %5 : vector<1x32xi32> to vector<16x32xi32>
    %18 = vector.broadcast %4 : vector<16x1xi32> to vector<16x32xi32>
    %19 = arith.cmpi eq, %17, %18 : vector<16x32xi32>
    %cst = arith.constant 0.000000e+00 : f32
    %20 = vector.broadcast %cst : f32 to vector<16x32xf32>
    %21 = arith.select %19, %3, %20 : vector<16x32xi1>, vector<16x32xf32>
    %cst_8 = arith.constant dense<0.000000e+00> : vector<16xf32>
    %22 = vector.multi_reduction <add>, %21, %cst_8 [1] : vector<16x32xf32> to vector<16xf32>
    %23 = vector.shape_cast %22 : vector<16xf32> to vector<16x1xf32>
    %cst_9 = arith.constant dense<0xFF800000> : vector<16xf32>
    %24 = vector.multi_reduction <maximumf>, %3, %cst_9 [1] : vector<16x32xf32> to vector<16xf32>
    %25 = vector.shape_cast %24 : vector<16xf32> to vector<16x1xf32>
    %26 = vector.broadcast %25 : vector<16x1xf32> to vector<16x32xf32>
    %27 = arith.cmpf oeq, %3, %26 : vector<16x32xf32>
    %c32_i32 = arith.constant 32 : i32
    %28 = vector.shape_cast %5 : vector<1x32xi32> to vector<1x32xi32>
    %29 = vector.broadcast %28 : vector<1x32xi32> to vector<16x32xi32>
    %30 = vector.broadcast %c32_i32 : i32 to vector<16x32xi32>
    %31 = arith.select %27, %29, %30 : vector<16x32xi1>, vector<16x32xi32>
    %cst_10 = arith.constant dense<2147483647> : vector<16xi32>
    %32 = vector.multi_reduction <minsi>, %31, %cst_10 [1] : vector<16x32xi32> to vector<16xi32>
    %33 = vector.shape_cast %32 : vector<16xi32> to vector<16x1xi32>
    %c0_11 = arith.constant 0 : index
    %c0_12 = arith.constant 0 : index
    %34 = vector.load %arg8[%c0_11, %c0_12] : memref<16x1xf32, #tpu.memory_space<vmem>>, vector<16x1xf32>
    %cst_13 = arith.constant 0.000000e+00 : f32
    %35 = vector.broadcast %cst_13 : f32 to vector<16x1xf32>
    %36 = arith.select %16, %23, %35 : vector<16x1xi1>, vector<16x1xf32>
    %37 = arith.addf %34, %36 : vector<16x1xf32>
    %c0_14 = arith.constant 0 : index
    %c0_15 = arith.constant 0 : index
    %38 = vector.load %arg8[%c0_14, %c0_15] : memref<16x1xf32, #tpu.memory_space<vmem>>, vector<16x1xf32>
    tpu.vector_store %arg8[%c0_14, %c0_15], %37 {strides = array<i32>} : memref<16x1xf32, #tpu.memory_space<vmem>>, vector<16x1xf32>,
    %c0_16 = arith.constant 0 : index
    %c0_17 = arith.constant 0 : index
    %39 = vector.load %arg9[%c0_16, %c0_17] : memref<16x1xf32, #tpu.memory_space<vmem>>, vector<16x1xf32>
    %40 = arith.cmpi eq, %33, %4 : vector<16x1xi32>
    %41 = arith.andi %16, %40 : vector<16x1xi1>
    %cst_18 = arith.constant 1.000000e+00 : f32
    %cst_19 = arith.constant 0.000000e+00 : f32
    %42 = vector.broadcast %cst_18 : f32 to vector<16x1xf32>
    %43 = vector.broadcast %cst_19 : f32 to vector<16x1xf32>
    %44 = arith.select %41, %42, %43 : vector<16x1xi1>, vector<16x1xf32>
    %45 = arith.addf %39, %44 : vector<16x1xf32>
    %c0_20 = arith.constant 0 : index
    %c0_21 = arith.constant 0 : index
    %46 = vector.load %arg9[%c0_20, %c0_21] : memref<16x1xf32, #tpu.memory_space<vmem>>, vector<16x1xf32>
    tpu.vector_store %arg9[%c0_20, %c0_21], %45 {strides = array<i32>} : memref<16x1xf32, #tpu.memory_space<vmem>>, vector<16x1xf32>,
    %c0_22 = arith.constant 0 : index
    %c0_23 = arith.constant 0 : index
    %47 = vector.load %arg10[%c0_22, %c0_23] : memref<16x1xf32, #tpu.memory_space<vmem>>, vector<16x1xf32>
    %48 = arith.extui %16 : vector<16x1xi1> to vector<16x1xi32>
    %49 = arith.sitofp %48 : vector<16x1xi32> to vector<16x1xf32>
    %50 = arith.addf %47, %49 : vector<16x1xf32>
    %c0_24 = arith.constant 0 : index
    %c0_25 = arith.constant 0 : index
    %51 = vector.load %arg10[%c0_24, %c0_25] : memref<16x1xf32, #tpu.memory_space<vmem>>, vector<16x1xf32>
    tpu.vector_store %arg10[%c0_24, %c0_25], %50 {strides = array<i32>} : memref<16x1xf32, #tpu.memory_space<vmem>>, vector<16x1xf32>,
    %c0_i32_26 = arith.constant 0 : i32
    %52 = arith.cmpi eq, %arg1, %c0_i32_26 : i32
    %53 = arith.extui %52 : i1 to i32
    %c0_i32_27 = arith.constant 0 : i32
    %54 = arith.cmpi ne, %53, %c0_i32_27 : i32
    scf.if %54 {
      %c0_28 = arith.constant 0 : index
      %c0_29 = arith.constant 0 : index
      %55 = vector.load %arg8[%c0_28, %c0_29] : memref<16x1xf32, #tpu.memory_space<vmem>>, vector<16x1xf32>
      %56 = vector.shape_cast %55 : vector<16x1xf32> to vector<1x16x1xf32>
      %cst_30 = arith.constant dense<0.000000e+00> : vector<1xf32>
      %57 = vector.multi_reduction <add>, %56, %cst_30 [1, 2] : vector<1x16x1xf32> to vector<1xf32>
      %58 = vector.shape_cast %57 : vector<1xf32> to vector<1x1x1xf32>
      %59 = vector.extract %58[0, 0, 0] : f32 from vector<1x1x1xf32>
      %60 = vector.broadcast %59 : f32 to vector<1x8x128xf32>
      %c0_31 = arith.constant 0 : index
      %c0_32 = arith.constant 0 : index
      %c0_33 = arith.constant 0 : index
      %61 = vector.load %arg5[%c0_31, %c0_32, %c0_33] : memref<1x8x128xf32, #tpu.memory_space<vmem>>, vector<1x8x128xf32>
      tpu.vector_store %arg5[%c0_31, %c0_32, %c0_33], %60 {strides = array<i32>} : memref<1x8x128xf32, #tpu.memory_space<vmem>>, vector<1x8x128xf32>,
      %c0_34 = arith.constant 0 : index
      %c0_35 = arith.constant 0 : index
      %62 = vector.load %arg9[%c0_34, %c0_35] : memref<16x1xf32, #tpu.memory_space<vmem>>, vector<16x1xf32>
      %63 = vector.shape_cast %62 : vector<16x1xf32> to vector<1x16x1xf32>
      %cst_36 = arith.constant dense<0.000000e+00> : vector<1xf32>
      %64 = vector.multi_reduction <add>, %63, %cst_36 [1, 2] : vector<1x16x1xf32> to vector<1xf32>
      %65 = vector.shape_cast %64 : vector<1xf32> to vector<1x1x1xf32>
      %66 = vector.extract %65[0, 0, 0] : f32 from vector<1x1x1xf32>
      %67 = vector.broadcast %66 : f32 to vector<1x8x128xf32>
      %c0_37 = arith.constant 0 : index
      %c0_38 = arith.constant 0 : index
      %c0_39 = arith.constant 0 : index
      %68 = vector.load %arg6[%c0_37, %c0_38, %c0_39] : memref<1x8x128xf32, #tpu.memory_space<vmem>>, vector<1x8x128xf32>
      tpu.vector_store %arg6[%c0_37, %c0_38, %c0_39], %67 {strides = array<i32>} : memref<1x8x128xf32, #tpu.memory_space<vmem>>, vector<1x8x128xf32>,
      %c0_40 = arith.constant 0 : index
      %c0_41 = arith.constant 0 : index
      %69 = vector.load %arg10[%c0_40, %c0_41] : memref<16x1xf32, #tpu.memory_space<vmem>>, vector<16x1xf32>
      %70 = vector.shape_cast %69 : vector<16x1xf32> to vector<1x16x1xf32>
      %cst_42 = arith.constant dense<0.000000e+00> : vector<1xf32>
      %71 = vector.multi_reduction <add>, %70, %cst_42 [1, 2] : vector<1x16x1xf32> to vector<1xf32>
      %72 = vector.shape_cast %71 : vector<1xf32> to vector<1x1x1xf32>
      %73 = vector.extract %72[0, 0, 0] : f32 from vector<1x1x1xf32>
      %74 = vector.broadcast %73 : f32 to vector<1x8x128xf32>
      %c0_43 = arith.constant 0 : index
      %c0_44 = arith.constant 0 : index
      %c0_45 = arith.constant 0 : index
      %75 = vector.load %arg7[%c0_43, %c0_44, %c0_45] : memref<1x8x128xf32, #tpu.memory_space<vmem>>, vector<1x8x128xf32>
      tpu.vector_store %arg7[%c0_43, %c0_44, %c0_45], %74 {strides = array<i32>} : memref<1x8x128xf32, #tpu.memory_space<vmem>>, vector<1x8x128xf32>,
    } else {
    }
    return
  }
  func.func @transform_0(%arg0: i32, %arg1: i32) -> (i32, i32) {
    %c0_i32 = arith.constant 0 : i32
    %c0_i32_0 = arith.constant 0 : i32
    %c0_i32_1 = arith.constant 0 : i32
    return %c0_i32, %c0_i32_0 : i32, i32
  }
  func.func @transform_1(%arg0: i32, %arg1: i32) -> (i32, i32) {
    %c1_i32 = arith.constant 1 : i32
    %0 = arith.muli %arg0, %c1_i32 : i32
    %1 = arith.addi %0, %arg1 : i32
    %c0_i32 = arith.constant 0 : i32
    %2 = arith.minsi %1, %c0_i32 : i32
    %c0_i32_0 = arith.constant 0 : i32
    %c0_i32_1 = arith.constant 0 : i32
    return %2, %c0_i32_0 : i32, i32
  }
  func.func @transform_2(%arg0: i32, %arg1: i32) -> (i32, i32) {
    %c1_i32 = arith.constant 1 : i32
    %0 = arith.muli %arg0, %c1_i32 : i32
    %1 = arith.addi %0, %arg1 : i32
    %c0_i32 = arith.constant 0 : i32
    %2 = arith.minsi %1, %c0_i32 : i32
    %c0_i32_0 = arith.constant 0 : i32
    %c0_i32_1 = arith.constant 0 : i32
    return %2, %c0_i32_0 : i32, i32
  }
  func.func @transform_3(%arg0: i32, %arg1: i32) -> (i32, i32, i32) {
    %c0_i32 = arith.constant 0 : i32
    %c0_i32_0 = arith.constant 0 : i32
    %c0_i32_1 = arith.constant 0 : i32
    return %arg0, %c0_i32, %c0_i32_0 : i32, i32, i32
  }
  func.func @transform_4(%arg0: i32, %arg1: i32) -> (i32, i32, i32) {
    %c0_i32 = arith.constant 0 : i32
    %c0_i32_0 = arith.constant 0 : i32
    %c0_i32_1 = arith.constant 0 : i32
    return %arg0, %c0_i32, %c0_i32_0 : i32, i32, i32
  }
  func.func @transform_5(%arg0: i32, %arg1: i32) -> (i32, i32, i32) {
    %c0_i32 = arith.constant 0 : i32
    %c0_i32_0 = arith.constant 0 : i32
    %c0_i32_1 = arith.constant 0 : i32
    return %arg0, %c0_i32, %c0_i32_0 : i32, i32, i32
  }
}

</mosaic_0001>

<llo_original>
// kernel: tpu_custom_call.1
$region0: #{tpu_custom_call.1}
  #allocation0 [shape = 'u32[]', space=smem, size = 0x4, offset = 0x4, fixed_abs, tag = 'smem constant byte address 0x4 - core index']
  #allocation1 [shape = 'u32[144,128]{1,0:T(1,128)}', space=vmem, size = 0x12000, scoped, tag = 'internal scratch']
  #allocation2 [shape = 'f32[16,1]{1,0:T(8,128)}', space=vmem, size = 0x2000, scoped, tag = 'scratch operand']
  #allocation3 [shape = 'f32[16,1]{1,0:T(8,128)}', space=vmem, size = 0x2000, scoped, tag = 'scratch operand']
  #allocation4 [shape = 'f32[16,1]{1,0:T(8,128)}', space=vmem, size = 0x2000, scoped, tag = 'scratch operand']
  %s0 = inlined_call_operand.vmem [shape: s32[1,32], index: 0, kind: input, shape index: {}]
  %s1 = inlined_call_operand.vmem [shape: f32[16,32], index: 1, kind: input, shape index: {}]
  %s2 = inlined_call_operand.vmem [shape: s32[16,1], index: 2, kind: input, shape index: {}]
  %s3 = inlined_call_operand.hbm [shape: f32[1,8,128], index: 3, kind: output, shape index: {0}]
  %s4 = inlined_call_operand.hbm [shape: f32[1,8,128], index: 4, kind: output, shape index: {1}]
  %s5 = inlined_call_operand.hbm [shape: f32[1,8,128], index: 5, kind: output, shape index: {2}]
  %6 = xla_tuple %s3, %s4, %s5
  %s7 = sld [smem:[#allocation0]]
  $region46: #{tpu_custom_call.1} parent=0
    _
  %s9 = ssub.s32 1, %s7
  %s10 = scalar_select 0, %s9, %s7
  $region1: #{tpu_custom_call.1} parent=0
    #allocation5 [shape = 'u8[4096]{0}', space=vmem, size = 0x1000, scoped, tag = 'output window, operand 0, single buffered']
    #allocation6 [shape = 's32[1]{0}', space=sflag, size = 0x4, scoped, tag = 'scoped memory for tpu_custom_call.1']
    #allocation7 [shape = 'u8[4096]{0}', space=vmem, size = 0x1000, scoped, tag = 'output window, operand 1, single buffered']
    #allocation8 [shape = 's32[1]{0}', space=sflag, size = 0x4, scoped, tag = 'scoped memory for tpu_custom_call.1']
    #allocation9 [shape = 'u8[4096]{0}', space=vmem, size = 0x1000, scoped, tag = 'output window, operand 2, single buffered']
    %11 = vsyncpa [#allocation6], 0
    %12 = vsyncpa [#allocation8], 0
    // Predicated region
    $region2: #{tpu_custom_call.1} parent=1 // pred_check
      _
    $region3: #{tpu_custom_call.1} parent=1 // pred_check_branch
      %14 = sbr.rel (0) target = $region5
    $region4: #{tpu_custom_call.1} parent=1 // pred_region
      _
    $region5: #{tpu_custom_call.1} parent=1 // pred_fallthru
      _
    // Predicated region
    $region6: #{tpu_custom_call.1} parent=1 // pred_check
      _
    $region7: #{tpu_custom_call.1} parent=1 // pred_check_branch
      %16 = sbr.rel (0) target = $region9
    $region8: #{tpu_custom_call.1} parent=1 // pred_region
      %s17 = sadd.s32 0, 0
      %p18 = scmp.lt.s32.totalorder %s17, 0
      %s19 = scalar_select %p18, %s17, 0
      %s20 = smul.u32 2, %s19
      %p21 = scmp.lt.s32.totalorder %s20, 1
      %s22 = scalar_select %p21, %s20, 1
      %s23 = smul.addr %s22, 8
      %s24 = scalar_lea.vmem %s1, %s23
      %s25 = sadd.s32 0, 0
      %p26 = scmp.lt.s32.totalorder %s25, 0
      %s27 = scalar_select %p26, %s25, 0
      %s28 = smul.u32 2, %s27
    $region9: #{tpu_custom_call.1} parent=1 // pred_fallthru
      _
    // Predicated region
    $region10: #{tpu_custom_call.1} parent=1 // pred_check
      _
    $region11: #{tpu_custom_call.1} parent=1 // pred_check_branch
      %30 = sbr.rel (0) target = $region13
    $region12: #{tpu_custom_call.1} parent=1 // pred_region
      %s31 = sadd.s32 0, 0
      %p32 = scmp.lt.s32.totalorder %s31, 0
      %s33 = scalar_select %p32, %s31, 0
      %s34 = smul.u32 2, %s33
      %p35 = scmp.lt.s32.totalorder %s34, 1
      %s36 = scalar_select %p35, %s34, 1
      %s37 = smul.addr %s36, 8
      %s38 = scalar_lea.vmem %s2, %s37
      %s39 = sadd.s32 0, 0
      %p40 = scmp.lt.s32.totalorder %s39, 0
      %s41 = scalar_select %p40, %s39, 0
      %s42 = smul.u32 2, %s41
    $region13: #{tpu_custom_call.1} parent=1 // pred_fallthru
      _
    %s43 = sadd.s32 0, 0
    %p44 = scmp.lt.s32.totalorder %s43, 0
    %s45 = scalar_select %p44, %s43, 0
    %s46 = smul.u32 2, %s45
    %p47 = scmp.lt.s32.totalorder %s46, 1
    %s48 = scalar_select %p47, %s46, 1
    %s49 = smul.addr %s48, 8
    %s50 = scalar_lea.vmem %s1, %s49
    %s51 = sadd.s32 0, 0
    %p52 = scmp.lt.s32.totalorder %s51, 0
    %s53 = scalar_select %p52, %s51, 0
    %s54 = smul.u32 2, %s53
    %p55 = scmp.lt.s32.totalorder %s54, 1
    %s56 = scalar_select %p55, %s54, 1
    %s57 = smul.addr %s56, 8
    %s58 = scalar_lea.vmem %s2, %s57
    %s59 = sadd.s32 0, 0
    %p60 = scmp.lt.s32.totalorder %s59, 0
    %s61 = scalar_select %p60, %s59, 0
    %s62 = smul.u32 2, %s61
    %p63 = scmp.lt.s32.totalorder %s62, 1
    %s64 = scalar_select %p63, %s62, 1
    %s65 = smul.addr %s64, 8
    %s66 = scalar_lea.vmem %s1, %s65
    %s67 = sadd.s32 0, 0
    %p68 = scmp.lt.s32.totalorder %s67, 0
    %s69 = scalar_select %p68, %s67, 0
    %s70 = smul.u32 2, %s69
    %s71 = sadd.s32 0, 0
    %p72 = scmp.lt.s32.totalorder %s71, 0
    %s73 = scalar_select %p72, %s71, 0
    %s74 = smul.u32 2, %s73
    %p75 = scmp.lt.s32.totalorder %s74, 1
    %s76 = scalar_select %p75, %s74, 1
    %s77 = smul.addr %s76, 8
    %s78 = scalar_lea.vmem %s2, %s77
    %s79 = sadd.s32 0, 0
    %p80 = scmp.lt.s32.totalorder %s79, 0
    %s81 = scalar_select %p80, %s79, 0
    %s82 = smul.u32 2, %s81
    %p83 = scmp.eq.s32.totalorder 0, 0
    // Predicated region
    $region14: #{tpu_custom_call.1} parent=1 // pred_check
      %p84 = pneg %p83
    $region15: #{tpu_custom_call.1} parent=1 // pred_check_branch
      %86 = sbr.rel (%p84) target = $region17
    $region16: #{tpu_custom_call.1} parent=1 // pred_region
      %vm87 = vcmask 7168
      %88 = vst.msk [vmem:[#allocation2] sm:$0xff] %vm87, 0.0
      %89 = vst.msk [vmem:[#allocation2 + $0x8] sm:$0xff] %vm87, 0.0
      %90 = vst.msk [vmem:[#allocation3] sm:$0xff] %vm87, 0.0
      %91 = vst.msk [vmem:[#allocation3 + $0x8] sm:$0xff] %vm87, 0.0
      %92 = vst.msk [vmem:[#allocation4] sm:$0xff] %vm87, 0.0
      %93 = vst.msk [vmem:[#allocation4 + $0x8] sm:$0xff] %vm87, 0.0
    $region17: #{tpu_custom_call.1} parent=1 // pred_fallthru
      _
    %v94 = vld [vmem:[%s66] sm:$0xff]
    %v95 = vld [vmem:[%s66 + $0x8] sm:$0xff]
    %v96 = vld [vmem:[%s78] sm:$0xff]
    %v97 = vld [vmem:[%s78 + $0x8] sm:$0xff]
    %v98 = vld [vmem:[%s0] sm:$0x1]
    %s99 = sadd.s32 0, 0
    %s100 = smul.u32 %s99, 16
    %v101 = vlaneseq
    %v102 = vshrl.u32 %v101, 7
    %v103 = vadd.s32 %v102, 8
    %v104 = vstv %s100
    %v105 = vadd.s32 %v104, %v102
    %v106 = vadd.s32 %v104, %v103
    %vm107 = vcmp.lt.s32.totalorder %v105, 16
    %vm108 = vcmp.lt.s32.totalorder %v106, 16
    %vm109 = vcmp.gt.s32.totalorder %v96, 0
    %vm110 = vcmp.gt.s32.totalorder %v97, 0
    %vm111 = vmand %vm109, %vm107
    %vm112 = vmand %vm110, %vm108
    %v113 = vlaneseq
    %v114 = vshrl.u32 %v113, 7
    %v115 = vsub.s32 0, %v114
    %v116 = vrot.slane %v98, %v115
    %117 = vset.pattern.permute.xlu0 0
    %118 = vperm.xlu0 %117, %v96
    %v119 = vpop.permute.xlu0 %118
    %120 = vset.pattern.permute.xlu0 0
    %121 = vperm.xlu0 %120, %v97
    %v122 = vpop.permute.xlu0 %121
    %vm123 = vcmp.eq.s32.totalorder %v116, %v119
    %vm124 = vcmp.eq.s32.totalorder %v116, %v122
    %v125 = vsel %vm123, %v94, 0.0
    %v126 = vsel %vm124, %v95, 0.0
    %vm127 = vcmask 261120
    %v128 = vsel %vm127, %v125, 0.0
    %129 = vadd.xlane.f32.xlu0 %v128
    %v130 = vpop.xlane.xlu0 %129
    %v131 = vsel %vm127, %v126, 0.0
    %132 = vadd.xlane.f32.xlu0 %v131
    %v133 = vpop.xlane.xlu0 %132
    %v134 = vsel %vm127, %v94, -inf
    %135 = vmax.xlane.f32.xlu0 %v134
    %v136 = vpop.xlane.xlu0 %135
    %v137 = vsel %vm127, %v95, -inf
    %138 = vmax.xlane.f32.xlu0 %v137
    %v139 = vpop.xlane.xlu0 %138
    %vm140 = vcmp.eq.f32.partialorder %v94, %v136
    %vm141 = vcmp.eq.f32.partialorder %v95, %v139
    %v142 = vsel %vm140, %v116, 32
    %v143 = vsel %vm141, %v116, 32
    %v144 = vsel %vm127, %v142, 2147483647
    %v145 = vand.u32 %v144, 65535
    %v146 = vshra.s32 %v144, 16
    %v147 = vcvt.s32.f32 %v145
    %v148 = vcvt.s32.f32 %v146
    %149 = vmin.xlane.f32.xlu0 %v148
    %v150 = vpop.xlane.xlu0 %149
    %vm151 = vcmp.eq.f32.partialorder %v148, %v150
    %v152 = vsel %vm151, %v147, inf
    %153 = vmin.xlane.f32.xlu0 %v152
    %v154 = vpop.xlane.xlu0 %153
    %v155 = vcvt.f32.s32 %v154
    %v156 = vcvt.f32.s32 %v150
    %v157 = vshll.u32 %v156, 16
    %v158 = vadd.s32 %v157, %v155
    %v159 = vsel %vm127, %v143, 2147483647
    %v160 = vand.u32 %v159, 65535
    %v161 = vshra.s32 %v159, 16
    %v162 = vcvt.s32.f32 %v160
    %v163 = vcvt.s32.f32 %v161
    %164 = vmin.xlane.f32.xlu0 %v163
    %v165 = vpop.xlane.xlu0 %164
    %vm166 = vcmp.eq.f32.partialorder %v163, %v165
    %v167 = vsel %vm166, %v162, inf
    %168 = vmin.xlane.f32.xlu0 %v167
    %v169 = vpop.xlane.xlu0 %168
    %v170 = vcvt.f32.s32 %v169
    %v171 = vcvt.f32.s32 %v165
    %v172 = vshll.u32 %v171, 16
    %v173 = vadd.s32 %v172, %v170
    %v174 = vld [vmem:[#allocation2] sm:$0xff]
    %v175 = vld [vmem:[#allocation2 + $0x8] sm:$0xff]
    %v176 = vsel %vm111, %v130, 0.0
    %v177 = vsel %vm112, %v133, 0.0
    %v178 = vadd.f32 %v174, %v176
    %v179 = vadd.f32 %v175, %v177
    %vm180 = vcmask 7168
    %181 = vst.msk [vmem:[#allocation2] sm:$0xff] %vm180, %v178
    %182 = vst.msk [vmem:[#allocation2 + $0x8] sm:$0xff] %vm180, %v179
    %v183 = vld [vmem:[#allocation3] sm:$0xff]
    %v184 = vld [vmem:[#allocation3 + $0x8] sm:$0xff]
    %vm185 = vcmp.eq.s32.totalorder %v158, %v96
    %vm186 = vcmp.eq.s32.totalorder %v173, %v97
    %vm187 = vmand %vm111, %vm185
    %vm188 = vmand %vm112, %vm186
    %v189 = vsel %vm187, 1.0, 0.0
    %v190 = vsel %vm188, 1.0, 0.0
    %v191 = vadd.f32 %v183, %v189
    %v192 = vadd.f32 %v184, %v190
    %193 = vst.msk [vmem:[#allocation3] sm:$0xff] %vm180, %v191
    %194 = vst.msk [vmem:[#allocation3 + $0x8] sm:$0xff] %vm180, %v192
    %v195 = vld [vmem:[#allocation4] sm:$0xff]
    %v196 = vld [vmem:[#allocation4 + $0x8] sm:$0xff]
    %v197 = vsel %vm111, 1, 0
    %v198 = vsel %vm112, 1, 0
    %v199 = vcvt.s32.f32 %v197
    %v200 = vcvt.s32.f32 %v198
    %v201 = vadd.f32 %v195, %v199
    %v202 = vadd.f32 %v196, %v200
    %203 = vst.msk [vmem:[#allocation4] sm:$0xff] %vm180, %v201
    %204 = vst.msk [vmem:[#allocation4 + $0x8] sm:$0xff] %vm180, %v202
    // Predicated region
    $region18: #{tpu_custom_call.1} parent=1 // pred_check
      %p205 = pneg %p83
    $region19: #{tpu_custom_call.1} parent=1 // pred_check_branch
      %207 = sbr.rel (%p205) target = $region21
    $region20: #{tpu_custom_call.1} parent=1 // pred_region
      %v208 = vld [vmem:[#allocation2] sm:$0xff]
      %v209 = vld [vmem:[#allocation2 + $0x8] sm:$0xff]
      %v210 = vsel %vm180, %v208, 0.0
      %v211 = vsel %vm180, %v209, 0.0
      %v212 = vadd.f32 %v210, %v211
      %213 = vadd.xlane.f32.xlu0 %v212
      %v214 = vpop.xlane.xlu0 %213
      %v215 = vrot.slane %v214, 4
      %v216 = vadd.f32 %v214, %v215
      %v217 = vrot.slane %v216, 2
      %v218 = vadd.f32 %v216, %v217
      %v219 = vrot.slane %v218, 1
      %v220 = vadd.f32 %v218, %v219
      %s221 = vtos %v220
      %v222 = vstv %s221
      %223 = vst [vmem:[#allocation5] sm:$0xff] %v222
      %v224 = vld [vmem:[#allocation3] sm:$0xff]
      %v225 = vld [vmem:[#allocation3 + $0x8] sm:$0xff]
      %v226 = vsel %vm180, %v224, 0.0
      %v227 = vsel %vm180, %v225, 0.0
      %v228 = vadd.f32 %v226, %v227
      %229 = vadd.xlane.f32.xlu0 %v228
      %v230 = vpop.xlane.xlu0 %229
      %v231 = vrot.slane %v230, 4
      %v232 = vadd.f32 %v230, %v231
      %v233 = vrot.slane %v232, 2
      %v234 = vadd.f32 %v232, %v233
      %v235 = vrot.slane %v234, 1
      %v236 = vadd.f32 %v234, %v235
      %s237 = vtos %v236
      %v238 = vstv %s237
      %239 = vst [vmem:[#allocation7] sm:$0xff] %v238
      %v240 = vld [vmem:[#allocation4] sm:$0xff]
      %v241 = vld [vmem:[#allocation4 + $0x8] sm:$0xff]
      %v242 = vsel %vm180, %v240, 0.0
      %v243 = vsel %vm180, %v241, 0.0
      %v244 = vadd.f32 %v242, %v243
      %245 = vadd.xlane.f32.xlu0 %v244
      %v246 = vpop.xlane.xlu0 %245
      %v247 = vrot.slane %v246, 4
      %v248 = vadd.f32 %v246, %v247
      %v249 = vrot.slane %v248, 2
      %v250 = vadd.f32 %v248, %v249
      %v251 = vrot.slane %v250, 1
      %v252 = vadd.f32 %v250, %v251
      %s253 = vtos %v252
      %v254 = vstv %s253
      %255 = vst [vmem:[#allocation9] sm:$0xff] %v254
    $region21: #{tpu_custom_call.1} parent=1 // pred_fallthru
      _
    // Predicated region
    $region22: #{tpu_custom_call.1} parent=1 // pred_check
      _
    $region23: #{tpu_custom_call.1} parent=1 // pred_check_branch
      %257 = sbr.rel (0) target = $region25
    $region24: #{tpu_custom_call.1} parent=1 // pred_region
      %s259 = ssub.s32 128, 128
      %260 = vsyncadd [#allocation6], %s259
      %s262 = sshll.u32 [#allocation5], 4
      %s263 = int_to_ptr.vmem [resolvable:$true] %s262
      %265 = dma.vmem_to_hbm [thread:$0]  %s263, 128, %s3, [#allocation6]
    $region25: #{tpu_custom_call.1} parent=1 // pred_fallthru
      _
    // Predicated region
    $region26: #{tpu_custom_call.1} parent=1 // pred_check
      _
    $region27: #{tpu_custom_call.1} parent=1 // pred_check_branch
      %267 = sbr.rel (0) target = $region29
    $region28: #{tpu_custom_call.1} parent=1 // pred_region
      %s269 = ssub.s32 128, 128
      %270 = vsyncadd [#allocation8], %s269
      %s272 = sshll.u32 [#allocation7], 4
      %s273 = int_to_ptr.vmem [resolvable:$true] %s272
      %275 = dma.vmem_to_hbm [thread:$0]  %s273, 128, %s4, [#allocation8]
    $region29: #{tpu_custom_call.1} parent=1 // pred_fallthru
      _
    // Predicated region
    $region30: #{tpu_custom_call.1} parent=1 // pred_check
      _
    $region31: #{tpu_custom_call.1} parent=1 // pred_check_branch
      %277 = sbr.rel (0) target = $region33
    $region32: #{tpu_custom_call.1} parent=1 // pred_region
      %s279 = ssub.s32 128, 128
      %280 = vsyncadd [#allocation8], %s279
      %s282 = sshll.u32 [#allocation9], 4
      %s283 = int_to_ptr.vmem [resolvable:$true] %s282
      %285 = dma.vmem_to_hbm [thread:$0]  %s283, 128, %s5, [#allocation8]
    $region33: #{tpu_custom_call.1} parent=1 // pred_fallthru
      _
    // Predicated region
    $region34: #{tpu_custom_call.1} parent=1 // pred_check
      _
    $region35: #{tpu_custom_call.1} parent=1 // pred_check_branch
      %287 = sbr.rel (0) target = $region37
    $region36: #{tpu_custom_call.1} parent=1 // pred_region
      %288 = dma.done [#allocation6], 128
    $region37: #{tpu_custom_call.1} parent=1 // pred_fallthru
      _
    // Predicated region
    $region38: #{tpu_custom_call.1} parent=1 // pred_check
      _
    $region39: #{tpu_custom_call.1} parent=1 // pred_check_branch
      %290 = sbr.rel (0) target = $region41
    $region40: #{tpu_custom_call.1} parent=1 // pred_region
      %291 = dma.done [#allocation8], 128
    $region41: #{tpu_custom_call.1} parent=1 // pred_fallthru
      _
    // Predicated region
    $region42: #{tpu_custom_call.1} parent=1 // pred_check
      _
    $region43: #{tpu_custom_call.1} parent=1 // pred_check_branch
      %293 = sbr.rel (0) target = $region45
    $region44: #{tpu_custom_call.1} parent=1 // pred_region
      %294 = dma.done [#allocation8], 128
    $region45: #{tpu_custom_call.1} parent=1 // pred_fallthru
      _
    %295 = vsyncpa [#allocation6], 1
    %296 = vsyncpa [#allocation8], 1

</llo_original>
